<compile_context>
chip_gen: v7x
topology: tpu7x:2x2x1
jax: 0.10.0
libtpu: 0.0.40
codegen_flags: <defaults>
</compile_context>

<pallas_src>
import jax
import jax.numpy as jnp
from jax.experimental import pallas as pl
from jax.experimental.pallas import tpu as pltpu


def _attention_kernel(mask_ref, inp_ref, enc_ref,
                      w_in_ref, w_oc_ref, w_oi_ref,
                      out_ref, attn_ref):
    # mask_ref : (Bb, S)      f32 additive mask (0.0 valid, -inf padded)
    # inp_ref  : (Tt, Bb, I)  bf16 decoder inputs (original time-major layout)
    # enc_ref  : (S, Bb, E)   bf16 encoder outputs (original time-major layout)
    # w_in_ref : (I, E)       bf16 input_proj weight (x @ W form)
    # w_oc_ref : (E, O)       bf16 output_proj slice acting on the context part
    # w_oi_ref : (I, O)       bf16 output_proj slice acting on the input part
    # out_ref  : (Bb, Tt, O)  f32 (batch-major; wrapper relayouts to (T, B, O))
    # attn_ref : (Bb, Tt, S)
    Tt, Bb, I = inp_ref.shape
    S, _, E = enc_ref.shape
    O = w_oc_ref.shape[1]

    # One-time in-VMEM relayout to batch-major (no wrapper HBM transposes of
    # the big activations).
    inp_bti = pltpu.einshape("tbi->bti", inp_ref[...])        # (Bb, Tt, I) bf16
    enc_bse = pltpu.einshape("sbe->bse", enc_ref[...])        # (Bb, S, E)  bf16
    add_mask = mask_ref[...]                                  # (Bb, S)     f32

    inp_2d = inp_bti.reshape(Bb * Tt, I)                      # (Bb*Tt, I) bf16

    # input_proj, batch folded into the matmul M dimension, f32 accumulation.
    x = jnp.dot(inp_2d, w_in_ref[...],
                preferred_element_type=jnp.float32)           # (Bb*Tt, E) f32
    x_bte = x.reshape(Bb, Tt, E).astype(jnp.bfloat16)         # (Bb, Tt, E)

    # attn_scores = bmm(x, enc^T) -- batched last-dim contraction, no enc.T.
    scores = jnp.einsum("bte,bse->bts", x_bte, enc_bse,
                        preferred_element_type=jnp.float32)   # (Bb, Tt, S) f32

    # masked_fill_(mask, -inf) as an additive mask (fully padded source rows
    # produce NaN, matching PyTorch masked_fill_ + softmax).
    scores = scores + add_mask[:, None, :]

    # Exact softmax over the source dimension (stored attn rows sum to 1).
    m = jnp.max(scores, axis=-1, keepdims=True)
    e = jnp.exp(scores - m)
    attn = e / jnp.sum(e, axis=-1, keepdims=True)             # (Bb, Tt, S) f32
    attn_ref[...] = attn.astype(attn_ref.dtype)

    # context = bmm(attn, enc)
    ctx = jnp.einsum("bts,bse->bte", attn.astype(jnp.bfloat16), enc_bse,
                     preferred_element_type=jnp.float32)      # (Bb, Tt, E) f32

    # cat((ctx, inp)) @ W_out^T == ctx @ W_oc + inp @ W_oi (no in-kernel concat),
    # again with batch folded into M.
    pre = (jnp.dot(ctx.reshape(Bb * Tt, E).astype(jnp.bfloat16), w_oc_ref[...],
                   preferred_element_type=jnp.float32)
           + jnp.dot(inp_2d, w_oi_ref[...],
                     preferred_element_type=jnp.float32))     # (Bb*Tt, O) f32

    out_ref[...] = jnp.tanh(pre).reshape(Bb, Tt, O)           # batch-major store


def _pick_block(full, cap):
    """Largest block that is either the whole dim or a multiple of 8 dividing it."""
    if full <= cap:
        return full
    cands = [c for c in range(8, cap + 1, 8) if full % c == 0]
    return max(cands) if cands else full


def attention_layer(inputs, encoder_outputs, encoder_padding_mask,
                    w_input_proj, w_output_proj, *,
                    max_block_b=32, max_block_t=128,
                    attn_dtype=jnp.float32):
    """
    inputs:               (T, B, I)  decoder states
    encoder_outputs:      (S, B, E)  encoder states
    encoder_padding_mask: (S, B)     bool (True = padded)
    w_input_proj:         (E, I)     PyTorch Linear weight (out, in)
    w_output_proj:        (O, E + I) PyTorch Linear weight (out, in) on cat(ctx, inp)
    returns: (out (T, B, O) f32, attn_scores (B, T, S) attn_dtype)
    """
    T, B, I = inputs.shape
    S, _, E = encoder_outputs.shape
    O = w_output_proj.shape[0]

    # Per-chip VMEM limit (~85% of capacity: ~108 MiB on v5e/v6e, ~54 MiB on v7x).
    try:
        vmem_cap = int(getattr(pltpu.get_tpu_info(), "vmem_capacity_bytes", 0))
    except Exception:
        vmem_cap = 0
    vmem_cap = vmem_cap or 64 * 1024 * 1024
    vmem_limit = max(32 * 1024 * 1024, min(int(vmem_cap * 0.85), 112 * 1024 * 1024))

    # Tile batch and target-time.  Bb*Tt is the MXU M dim of the two folded
    # projections; Tt also bounds the live f32 (Bb, Tt, S) score intermediates.
    block_b = _pick_block(B, max_block_b)
    block_t = _pick_block(T, max_block_t)
    score_budget = vmem_limit // 3       # headroom for ~4 live f32 score tensors

    def _score_bytes(bb, bt):
        return 4 * bb * bt * S * 4

    while block_t % 16 == 0 and _score_bytes(block_b, block_t) > score_budget:
        block_t //= 2
    while block_b % 16 == 0 and _score_bytes(block_b, block_t) > score_budget:
        block_b //= 2
    assert B % block_b == 0 and T % block_t == 0, "block sizes must divide B / T"
    nb, nt = B // block_b, T // block_t

    # Wrapper-side prep only: additive mask in (B, S) layout, bf16 activations
    # (halves HBM reads + VMEM blocks), weights transposed/split + bf16.
    mask_add = jnp.transpose(
        jnp.where(encoder_padding_mask, -jnp.inf, 0.0).astype(jnp.float32))   # (B, S)
    inp_bf = inputs.astype(jnp.bfloat16)                                      # (T, B, I)
    enc_bf = encoder_outputs.astype(jnp.bfloat16)                             # (S, B, E)
    w_in_bf = jnp.transpose(w_input_proj).astype(jnp.bfloat16)                # (I, E)
    w_out_t = jnp.transpose(w_output_proj)                                    # (E+I, O)
    w_oc_bf = w_out_t[:E, :].astype(jnp.bfloat16)                             # (E, O)
    w_oi_bf = w_out_t[E:, :].astype(jnp.bfloat16)                             # (I, O)

    out_bto, attn_bts = pl.pallas_call(
        _attention_kernel,
        out_shape=(jax.ShapeDtypeStruct((B, T, O), jnp.float32),
                   jax.ShapeDtypeStruct((B, T, S), attn_dtype)),
        grid_spec=pltpu.PrefetchScalarGridSpec(
            num_scalar_prefetch=0,
            grid=(nb, nt),      # t innermost -> enc/mask/weight blocks stay resident
            in_specs=[
                pl.BlockSpec((block_b, S), lambda b, t: (b, 0)),
                pl.BlockSpec((block_t, block_b, I), lambda b, t: (t, b, 0)),
                pl.BlockSpec((S, block_b, E), lambda b, t: (0, b, 0)),
                pl.BlockSpec((I, E), lambda b, t: (0, 0)),
                pl.BlockSpec((E, O), lambda b, t: (0, 0)),
                pl.BlockSpec((I, O), lambda b, t: (0, 0)),
            ],
            out_specs=[
                pl.BlockSpec((block_b, block_t, O), lambda b, t: (b, t, 0)),
                pl.BlockSpec((block_b, block_t, S), lambda b, t: (b, t, 0)),
            ],
        ),
        compiler_params=pltpu.CompilerParams(
            dimension_semantics=("parallel", "parallel"),
            vmem_limit_bytes=vmem_limit),
    )(mask_add, inp_bf, enc_bf, w_in_bf, w_oc_bf, w_oi_bf)

    # Single small relayout of the output back to the module's (T, B, O) layout
    # (cheaper than an XLU transpose in the kernel epilogue + lane-sparse store).
    return jnp.transpose(out_bto, (1, 0, 2)), attn_bts


def _reference(inputs, encoder_outputs, encoder_padding_mask, w_in, w_out):
    # Pure-JAX f32 replica of the PyTorch forward for verification.
    inp = jnp.transpose(inputs, (1, 0, 2))
    enc = jnp.transpose(encoder_outputs, (1, 0, 2))
    mask = jnp.transpose(encoder_padding_mask, (1, 0))[:, None, :]
    x = inp @ w_in.T
    scores = jnp.einsum("bte,bse->bts", x, enc)
    scores = jnp.where(mask, -jnp.inf, scores)
    attn = jax.nn.softmax(scores, axis=-1)
    ctx = jnp.einsum("bts,bse->bte", attn, enc)
    cat = jnp.concatenate([ctx, inp], axis=-1)
    out = jnp.tanh(cat @ w_out.T)
    return jnp.transpose(out, (1, 0, 2)), attn


if __name__ == "__main__":
    # small shapes consistent with the module
    T, S, B = 8, 16, 2          # tgt_len, src_len, batch
    I, E, O = 32, 32, 32        # input_embed_dim, source_embed_dim, output_embed_dim

    key = jax.random.PRNGKey(0)
    k1, k2, k3, k4 = jax.random.split(key, 4)

    inputs = jax.random.normal(k1, (T, B, I), dtype=jnp.float32)
    encoder_outputs = jax.random.normal(k2, (S, B, E), dtype=jnp.float32)

    # deterministic weights (bias=False in the module)
    w_input_proj = 0.1 * jax.random.normal(k3, (E, I), dtype=jnp.float32)
    w_output_proj = 0.1 * jax.random.normal(k4, (O, E + I), dtype=jnp.float32)

    # padding mask: positions >= length are padded (True); no fully-padded rows
    lengths = jnp.array([12, 16], dtype=jnp.int32)
    encoder_padding_mask = (jnp.arange(S)[:, None] >= lengths[None, :])  # (S, B) bool

    out, attn = attention_layer(inputs, encoder_outputs, encoder_padding_mask,
                                w_input_proj, w_output_proj)
    out = jax.block_until_ready(out)
    attn = jax.block_until_ready(attn)

    ref_out, ref_attn = _reference(inputs, encoder_outputs, encoder_padding_mask,
                                   w_input_proj, w_output_proj)

    # Tolerance loosened vs the f32 reference because the kernel feeds the MXU
    # bf16 operands (with f32 accumulation).
    assert jnp.allclose(out, ref_out, atol=5e-2, rtol=5e-2), "output mismatch"
    assert jnp.allclose(attn, ref_attn, atol=5e-2, rtol=5e-2), "attn mismatch"
    assert not jnp.any(jnp.isnan(out)) and not jnp.any(jnp.isnan(attn))

    print("KERNEL_OK")
</pallas_src>

<mosaic_0001>
module attributes {stable_mosaic.version = 11 : i64} {
  func.func @_attention_kernel(%arg0: i32, %arg1: i32, %arg2: memref<2x16xf32, #tpu.memory_space<vmem>>, %arg3: memref<8x2x32xbf16, #tpu.memory_space<vmem>>, %arg4: memref<16x2x32xbf16, #tpu.memory_space<vmem>>, %arg5: memref<32x32xbf16, #tpu.memory_space<vmem>>, %arg6: memref<32x32xbf16, #tpu.memory_space<vmem>>, %arg7: memref<32x32xbf16, #tpu.memory_space<vmem>>, %arg8: memref<2x8x32xf32, #tpu.memory_space<vmem>>, %arg9: memref<2x8x16xf32, #tpu.memory_space<vmem>>) attributes {dimension_semantics = [#tpu.dimension_semantics<parallel>, #tpu.dimension_semantics<parallel>], iteration_bounds = array<i64: 1, 1>, scalar_prefetch = 0 : i64, scratch_operands = 0 : i64, tpu.core_type = #tpu.core_type<tc>, window_params = [{transform_indices = @transform_0, window_bounds = array<i64: 2, 16>}, {transform_indices = @transform_1, window_bounds = array<i64: 8, 2, 32>}, {transform_indices = @transform_2, window_bounds = array<i64: 16, 2, 32>}, {pipeline_mode = #tpu.pipeline_mode<synchronous>, transform_indices = @transform_3, window_bounds = array<i64: 32, 32>}, {pipeline_mode = #tpu.pipeline_mode<synchronous>, transform_indices = @transform_4, window_bounds = array<i64: 32, 32>}, {pipeline_mode = #tpu.pipeline_mode<synchronous>, transform_indices = @transform_5, window_bounds = array<i64: 32, 32>}, {transform_indices = @transform_6, window_bounds = array<i64: 2, 8, 32>}, {transform_indices = @transform_7, window_bounds = array<i64: 2, 8, 16>}]} {
    %c0 = arith.constant 0 : index
    %c0_0 = arith.constant 0 : index
    %c0_1 = arith.constant 0 : index
    %0 = vector.load %arg3[%c0, %c0_0, %c0_1] : memref<8x2x32xbf16, #tpu.memory_space<vmem>>, vector<8x2x32xbf16>
    %1 = tpu.transpose %0, [1, 0, 2] : vector<8x2x32xbf16> -> vector<2x8x32xbf16>
    %c0_2 = arith.constant 0 : index
    %c0_3 = arith.constant 0 : index
    %c0_4 = arith.constant 0 : index
    %2 = vector.load %arg4[%c0_2, %c0_3, %c0_4] : memref<16x2x32xbf16, #tpu.memory_space<vmem>>, vector<16x2x32xbf16>
    %3 = tpu.transpose %2, [1, 0, 2] : vector<16x2x32xbf16> -> vector<2x16x32xbf16>
    %c0_5 = arith.constant 0 : index
    %c0_6 = arith.constant 0 : index
    %4 = vector.load %arg2[%c0_5, %c0_6] : memref<2x16xf32, #tpu.memory_space<vmem>>, vector<2x16xf32>
    %5 = vector.shape_cast %1 : vector<2x8x32xbf16> to vector<16x32xbf16>
    %c0_7 = arith.constant 0 : index
    %c0_8 = arith.constant 0 : index
    %6 = vector.load %arg5[%c0_7, %c0_8] : memref<32x32xbf16, #tpu.memory_space<vmem>>, vector<32x32xbf16>
    %cst = arith.constant dense<0.000000e+00> : vector<16x32xf32>
    %7 = tpu.matmul %5, %6, %cst {dimension_numbers = #tpu.dot_dimension_numbers<[1], [0], [0], [1], [0, 0, 1, 1], [], []>} : vector<16x32xbf16>, vector<32x32xbf16>, vector<16x32xf32> -> vector<16x32xf32>
    %8 = vector.shape_cast %7 : vector<16x32xf32> to vector<2x8x32xf32>
    %9 = arith.truncf %8 : vector<2x8x32xf32> to vector<2x8x32xbf16>
    "tpu.trace_start"() <{level = 10 : i32, message = "bte,bse->bts"}> : () -> ()
    %cst_9 = arith.constant dense<0.000000e+00> : vector<2x8x16xf32>
    %10 = tpu.matmul %9, %3, %cst_9 {dimension_numbers = #tpu.dot_dimension_numbers<[2], [2], [1], [1], [0, 0, 0, 1, 1, 1], [0], [0]>} : vector<2x8x32xbf16>, vector<2x16x32xbf16>, vector<2x8x16xf32> -> vector<2x8x16xf32>
    "tpu.trace_stop"() : () -> ()
    %11 = vector.shape_cast %4 : vector<2x16xf32> to vector<2x1x16xf32>
    %12 = vector.broadcast %11 : vector<2x1x16xf32> to vector<2x8x16xf32>
    %13 = arith.addf %10, %12 : vector<2x8x16xf32>
    %cst_10 = arith.constant dense<0xFF800000> : vector<2x8xf32>
    %14 = vector.multi_reduction <maximumf>, %13, %cst_10 [2] : vector<2x8x16xf32> to vector<2x8xf32>
    %15 = vector.shape_cast %14 : vector<2x8xf32> to vector<2x8x1xf32>
    %16 = vector.broadcast %15 : vector<2x8x1xf32> to vector<2x8x16xf32>
    %17 = arith.subf %13, %16 : vector<2x8x16xf32>
    %18 = math.exp %17 : vector<2x8x16xf32>
    %cst_11 = arith.constant dense<0.000000e+00> : vector<2x8xf32>
    %19 = vector.multi_reduction <add>, %18, %cst_11 [2] : vector<2x8x16xf32> to vector<2x8xf32>
    %20 = vector.shape_cast %19 : vector<2x8xf32> to vector<2x8x1xf32>
    %21 = vector.broadcast %20 : vector<2x8x1xf32> to vector<2x8x16xf32>
    %22 = arith.divf %18, %21 : vector<2x8x16xf32>
    %c0_12 = arith.constant 0 : index
    %c0_13 = arith.constant 0 : index
    %c0_14 = arith.constant 0 : index
    %23 = vector.load %arg9[%c0_12, %c0_13, %c0_14] : memref<2x8x16xf32, #tpu.memory_space<vmem>>, vector<2x8x16xf32>
    tpu.vector_store %arg9[%c0_12, %c0_13, %c0_14], %22 {strides = array<i32>} : memref<2x8x16xf32, #tpu.memory_space<vmem>>, vector<2x8x16xf32>,
    %24 = arith.truncf %22 : vector<2x8x16xf32> to vector<2x8x16xbf16>
    "tpu.trace_start"() <{level = 10 : i32, message = "bts,bse->bte"}> : () -> ()
    %cst_15 = arith.constant dense<0.000000e+00> : vector<2x8x32xf32>
    %25 = tpu.matmul %24, %3, %cst_15 {dimension_numbers = #tpu.dot_dimension_numbers<[2], [1], [1], [2], [0, 0, 0, 1, 1, 2], [0], [0]>} : vector<2x8x16xbf16>, vector<2x16x32xbf16>, vector<2x8x32xf32> -> vector<2x8x32xf32>
    "tpu.trace_stop"() : () -> ()
    %26 = vector.shape_cast %25 : vector<2x8x32xf32> to vector<16x32xf32>
    %27 = arith.truncf %26 : vector<16x32xf32> to vector<16x32xbf16>
    %c0_16 = arith.constant 0 : index
    %c0_17 = arith.constant 0 : index
    %28 = vector.load %arg6[%c0_16, %c0_17] : memref<32x32xbf16, #tpu.memory_space<vmem>>, vector<32x32xbf16>
    %cst_18 = arith.constant dense<0.000000e+00> : vector<16x32xf32>
    %29 = tpu.matmul %27, %28, %cst_18 {dimension_numbers = #tpu.dot_dimension_numbers<[1], [0], [0], [1], [0, 0, 1, 1], [], []>} : vector<16x32xbf16>, vector<32x32xbf16>, vector<16x32xf32> -> vector<16x32xf32>
    %c0_19 = arith.constant 0 : index
    %c0_20 = arith.constant 0 : index
    %30 = vector.load %arg7[%c0_19, %c0_20] : memref<32x32xbf16, #tpu.memory_space<vmem>>, vector<32x32xbf16>
    %cst_21 = arith.constant dense<0.000000e+00> : vector<16x32xf32>
    %31 = tpu.matmul %5, %30, %cst_21 {dimension_numbers = #tpu.dot_dimension_numbers<[1], [0], [0], [1], [0, 0, 1, 1], [], []>} : vector<16x32xbf16>, vector<32x32xbf16>, vector<16x32xf32> -> vector<16x32xf32>
    %32 = arith.addf %29, %31 : vector<16x32xf32>
    %33 = math.tanh %32 : vector<16x32xf32>
    %34 = vector.shape_cast %33 : vector<16x32xf32> to vector<2x8x32xf32>
    %c0_22 = arith.constant 0 : index
    %c0_23 = arith.constant 0 : index
    %c0_24 = arith.constant 0 : index
    %35 = vector.load %arg8[%c0_22, %c0_23, %c0_24] : memref<2x8x32xf32, #tpu.memory_space<vmem>>, vector<2x8x32xf32>
    tpu.vector_store %arg8[%c0_22, %c0_23, %c0_24], %34 {strides = array<i32>} : memref<2x8x32xf32, #tpu.memory_space<vmem>>, vector<2x8x32xf32>,
    return
  }
  func.func @transform_0(%arg0: i32, %arg1: i32) -> (i32, i32) {
    %c0_i32 = arith.constant 0 : i32
    %c0_i32_0 = arith.constant 0 : i32
    return %arg0, %c0_i32 : i32, i32
  }
  func.func @transform_1(%arg0: i32, %arg1: i32) -> (i32, i32, i32) {
    %c0_i32 = arith.constant 0 : i32
    %c0_i32_0 = arith.constant 0 : i32
    return %arg1, %arg0, %c0_i32 : i32, i32, i32
  }
  func.func @transform_2(%arg0: i32, %arg1: i32) -> (i32, i32, i32) {
    %c0_i32 = arith.constant 0 : i32
    %c0_i32_0 = arith.constant 0 : i32
    %c0_i32_1 = arith.constant 0 : i32
    return %c0_i32, %arg0, %c0_i32_0 : i32, i32, i32
  }
  func.func @transform_3(%arg0: i32, %arg1: i32) -> (i32, i32) {
    %c0_i32 = arith.constant 0 : i32
    %c0_i32_0 = arith.constant 0 : i32
    %c0_i32_1 = arith.constant 0 : i32
    return %c0_i32, %c0_i32_0 : i32, i32
  }
  func.func @transform_4(%arg0: i32, %arg1: i32) -> (i32, i32) {
    %c0_i32 = arith.constant 0 : i32
    %c0_i32_0 = arith.constant 0 : i32
    %c0_i32_1 = arith.constant 0 : i32
    return %c0_i32, %c0_i32_0 : i32, i32
  }
  func.func @transform_5(%arg0: i32, %arg1: i32) -> (i32, i32) {
    %c0_i32 = arith.constant 0 : i32
    %c0_i32_0 = arith.constant 0 : i32
    %c0_i32_1 = arith.constant 0 : i32
    return %c0_i32, %c0_i32_0 : i32, i32
  }
  func.func @transform_6(%arg0: i32, %arg1: i32) -> (i32, i32, i32) {
    %c0_i32 = arith.constant 0 : i32
    %c0_i32_0 = arith.constant 0 : i32
    return %arg0, %arg1, %c0_i32 : i32, i32, i32
  }
  func.func @transform_7(%arg0: i32, %arg1: i32) -> (i32, i32, i32) {
    %c0_i32 = arith.constant 0 : i32
    %c0_i32_0 = arith.constant 0 : i32
    return %arg0, %arg1, %c0_i32 : i32, i32, i32
  }
}

</mosaic_0001>

<llo_original>
// kernel: tpu_custom_call.1
$region0: #{tpu_custom_call.1}
  #allocation0 [shape = 'u32[]', space=smem, size = 0x4, offset = 0x4, fixed_abs, tag = 'smem constant byte address 0x4 - core index']
  #allocation1 [shape = 'u32[144,128]{1,0:T(1,128)}', space=vmem, size = 0x12000, scoped, tag = 'internal scratch']
  %s0 = inlined_call_operand.hbm [shape: f32[2,16], index: 0, kind: input, shape index: {}]
  %s1 = inlined_call_operand.hbm [shape: bf16[8,2,32], index: 1, kind: input, shape index: {}]
  %s2 = inlined_call_operand.hbm [shape: bf16[16,2,32], index: 2, kind: input, shape index: {}]
  %s3 = inlined_call_operand.hbm [shape: bf16[32,32], index: 3, kind: input, shape index: {}]
  %s4 = inlined_call_operand.hbm [shape: bf16[32,32], index: 4, kind: input, shape index: {}]
  %s5 = inlined_call_operand.vmem [shape: bf16[32,32], index: 5, kind: input, shape index: {}]
  %s6 = inlined_call_operand.hbm [shape: f32[2,8,32], index: 6, kind: output, shape index: {0}]
  %s7 = inlined_call_operand.hbm [shape: f32[2,8,16], index: 7, kind: output, shape index: {1}]
  %8 = xla_tuple %s6, %s7
  %s9 = sld [smem:[#allocation0]]
  $region62: #{tpu_custom_call.1} parent=0
    _
  %s11 = ssub.s32 1, %s9
  %s12 = scalar_select 0, %s11, %s9
  $region1: #{tpu_custom_call.1} parent=0
    #allocation2 [shape = 'u8[1024]{0}', space=vmem, size = 0x400, scoped, tag = 'input window, operand 0, single buffered']
    #allocation3 [shape = 's32[1]{0}', space=sflag, size = 0x4, scoped, tag = 'scoped memory for tpu_custom_call.1']
    #allocation4 [shape = 's32[1]{0}', space=sflag, size = 0x4, scoped, tag = 'scoped memory for tpu_custom_call.1']
    #allocation5 [shape = 'u8[4096]{0}', space=vmem, size = 0x1000, scoped, tag = 'input window, operand 1, single buffered']
    #allocation6 [shape = 's32[1]{0}', space=sflag, size = 0x4, scoped, tag = 'scoped memory for tpu_custom_call.1']
    #allocation7 [shape = 'u8[8192]{0}', space=vmem, size = 0x2000, scoped, tag = 'input window, operand 2, single buffered']
    #allocation8 [shape = 'u8[8192]{0}', space=vmem, size = 0x2000, scoped, tag = 'input window, operand 3, single buffered']
    #allocation9 [shape = 's32[1]{0}', space=sflag, size = 0x4, scoped, tag = 'scoped memory for tpu_custom_call.1']
    #allocation10 [shape = 'u8[8192]{0}', space=vmem, size = 0x2000, scoped, tag = 'input window, operand 4, single buffered']
    #allocation11 [shape = 'u8[8192]{0}', space=vmem, size = 0x2000, scoped, tag = 'output window, operand 0, single buffered']
    #allocation12 [shape = 'u8[8192]{0}', space=vmem, size = 0x2000, scoped, tag = 'output window, operand 1, single buffered']
    #allocation13 [shape = 's32[1]{0}', space=sflag, size = 0x4, scoped, tag = 'scoped memory for tpu_custom_call.1']
    %13 = vsyncpa [#allocation3], 0
    %14 = vsyncpa [#allocation6], 0
    %15 = vsyncpa [#allocation9], 0
    %16 = vsyncpa [#allocation4], 0
    %17 = vsyncpa [#allocation13], 0
    // Predicated region
    $region2: #{tpu_custom_call.1} parent=1 // pred_check
      _
    $region3: #{tpu_custom_call.1} parent=1 // pred_check_branch
      %19 = sbr.rel (0) target = $region5
    $region4: #{tpu_custom_call.1} parent=1 // pred_region
      %s21 = ssub.s32 32, 32
      %22 = vsyncadd [#allocation3], %s21
      %s24 = sshll.u32 [#allocation2], 4
      %s25 = int_to_ptr.vmem [resolvable:$true] %s24
      %27 = dma.hbm_to_vmem [thread:$0]  %s0, 32, %s25, [#allocation3]
    $region5: #{tpu_custom_call.1} parent=1 // pred_fallthru
      _
    // Predicated region
    $region6: #{tpu_custom_call.1} parent=1 // pred_check
      _
    $region7: #{tpu_custom_call.1} parent=1 // pred_check_branch
      %29 = sbr.rel (0) target = $region9
    $region8: #{tpu_custom_call.1} parent=1 // pred_region
      %s31 = ssub.s32 128, 128
      %32 = vsyncadd [#allocation6], %s31
      %s33 = sshll.u32 [#allocation5], 4
      %s34 = int_to_ptr.vmem [resolvable:$true] %s33
      %39 = dma.hbm_to_vmem [thread:$0]  %s1, 128, %s34, [#allocation6], 16, 16, 1
    $region9: #{tpu_custom_call.1} parent=1 // pred_fallthru
      _
    // Predicated region
    $region10: #{tpu_custom_call.1} parent=1 // pred_check
      _
    $region11: #{tpu_custom_call.1} parent=1 // pred_check_branch
      %41 = sbr.rel (0) target = $region13
    $region12: #{tpu_custom_call.1} parent=1 // pred_region
      %s43 = ssub.s32 256, 256
      %44 = vsyncadd [#allocation6], %s43
      %s45 = sshll.u32 [#allocation7], 4
      %s46 = int_to_ptr.vmem [resolvable:$true] %s45
      %51 = dma.hbm_to_vmem [thread:$0]  %s2, 256, %s46, [#allocation6], 16, 16, 1
    $region13: #{tpu_custom_call.1} parent=1 // pred_fallthru
      _
    // Predicated region
    $region14: #{tpu_custom_call.1} parent=1 // pred_check
      _
    $region15: #{tpu_custom_call.1} parent=1 // pred_check_branch
      %53 = sbr.rel (0) target = $region17
    $region16: #{tpu_custom_call.1} parent=1 // pred_region
      %s55 = ssub.s32 256, 256
      %56 = vsyncadd [#allocation9], %s55
      %s57 = sshll.u32 [#allocation8], 4
      %s58 = int_to_ptr.vmem [resolvable:$true] %s57
      %63 = dma.hbm_to_vmem [thread:$0]  %s3, 256, %s58, [#allocation9], 64, 64, 4
    $region17: #{tpu_custom_call.1} parent=1 // pred_fallthru
      _
    // Predicated region
    $region18: #{tpu_custom_call.1} parent=1 // pred_check
      _
    $region19: #{tpu_custom_call.1} parent=1 // pred_check_branch
      %65 = sbr.rel (0) target = $region21
    $region20: #{tpu_custom_call.1} parent=1 // pred_region
      %s67 = ssub.s32 256, 256
      %68 = vsyncadd [#allocation9], %s67
      %s69 = sshll.u32 [#allocation10], 4
      %s70 = int_to_ptr.vmem [resolvable:$true] %s69
      %75 = dma.hbm_to_vmem [thread:$0]  %s4, 256, %s70, [#allocation9], 64, 64, 4
    $region21: #{tpu_custom_call.1} parent=1 // pred_fallthru
      _
    // Predicated region
    $region22: #{tpu_custom_call.1} parent=1 // pred_check
      _
    $region23: #{tpu_custom_call.1} parent=1 // pred_check_branch
      %77 = sbr.rel (0) target = $region25
    $region24: #{tpu_custom_call.1} parent=1 // pred_region
      _
    $region25: #{tpu_custom_call.1} parent=1 // pred_fallthru
      _
    // Predicated region
    $region26: #{tpu_custom_call.1} parent=1 // pred_check
      _
    $region27: #{tpu_custom_call.1} parent=1 // pred_check_branch
      %79 = sbr.rel (0) target = $region29
    $region28: #{tpu_custom_call.1} parent=1 // pred_region
      %80 = dma.done [#allocation3], 32
    $region29: #{tpu_custom_call.1} parent=1 // pred_fallthru
      _
    // Predicated region
    $region30: #{tpu_custom_call.1} parent=1 // pred_check
      _
    $region31: #{tpu_custom_call.1} parent=1 // pred_check_branch
      %82 = sbr.rel (0) target = $region33
    $region32: #{tpu_custom_call.1} parent=1 // pred_region
      %83 = dma.done [#allocation6], 128
    $region33: #{tpu_custom_call.1} parent=1 // pred_fallthru
      _
    // Predicated region
    $region34: #{tpu_custom_call.1} parent=1 // pred_check
      _
    $region35: #{tpu_custom_call.1} parent=1 // pred_check_branch
      %85 = sbr.rel (0) target = $region37
    $region36: #{tpu_custom_call.1} parent=1 // pred_region
      %86 = dma.done [#allocation6], 256
    $region37: #{tpu_custom_call.1} parent=1 // pred_fallthru
      _
    // Predicated region
    $region38: #{tpu_custom_call.1} parent=1 // pred_check
      _
    $region39: #{tpu_custom_call.1} parent=1 // pred_check_branch
      %88 = sbr.rel (0) target = $region41
    $region40: #{tpu_custom_call.1} parent=1 // pred_region
      %89 = dma.done [#allocation9], 256
    $region41: #{tpu_custom_call.1} parent=1 // pred_fallthru
      _
    // Predicated region
    $region42: #{tpu_custom_call.1} parent=1 // pred_check
      _
    $region43: #{tpu_custom_call.1} parent=1 // pred_check_branch
      %91 = sbr.rel (0) target = $region45
    $region44: #{tpu_custom_call.1} parent=1 // pred_region
      %92 = dma.done [#allocation9], 256
    $region45: #{tpu_custom_call.1} parent=1 // pred_fallthru
      _
    %v94 = vld [vmem:[#allocation5] sm:$0x1]
    %v95 = vld [vmem:[#allocation5 + $0x1] sm:$0x1]
    %v96 = vld [vmem:[#allocation5 + $0x2] sm:$0x1]
    %v97 = vld [vmem:[#allocation5 + $0x3] sm:$0x1]
    %v98 = vld [vmem:[#allocation5 + $0x4] sm:$0x1]
    %v99 = vld [vmem:[#allocation5 + $0x5] sm:$0x1]
    %v100 = vld [vmem:[#allocation5 + $0x6] sm:$0x1]
    %v101 = vld [vmem:[#allocation5 + $0x7] sm:$0x1]
    %v104 = vpack.i.b16 %v95, %v94
    %v105 = vshrl.u32 %v94, 16
    %v106 = vshrl.u32 %v95, 16
    %v107 = vpack.i.b16 %v106, %v105
    %v110 = vpack.i.b16 %v97, %v96
    %v111 = vshrl.u32 %v96, 16
    %v112 = vshrl.u32 %v97, 16
    %v113 = vpack.i.b16 %v112, %v111
    %v116 = vpack.i.b16 %v99, %v98
    %v117 = vshrl.u32 %v98, 16
    %v118 = vshrl.u32 %v99, 16
    %v119 = vpack.i.b16 %v118, %v117
    %v122 = vpack.i.b16 %v101, %v100
    %v123 = vshrl.u32 %v100, 16
    %v124 = vshrl.u32 %v101, 16
    %v125 = vpack.i.b16 %v124, %v123
    %v126 = vld [vmem:[#allocation7] sm:$0x1]
    %v127 = vld [vmem:[#allocation7 + $0x1] sm:$0x1]
    %v128 = vld [vmem:[#allocation7 + $0x2] sm:$0x1]
    %v129 = vld [vmem:[#allocation7 + $0x3] sm:$0x1]
    %v130 = vld [vmem:[#allocation7 + $0x4] sm:$0x1]
    %v131 = vld [vmem:[#allocation7 + $0x5] sm:$0x1]
    %v132 = vld [vmem:[#allocation7 + $0x6] sm:$0x1]
    %v133 = vld [vmem:[#allocation7 + $0x7] sm:$0x1]
    %v134 = vld [vmem:[#allocation7 + $0x8] sm:$0x1]
    %v135 = vld [vmem:[#allocation7 + $0x9] sm:$0x1]
    %v136 = vld [vmem:[#allocation7 + $0xa] sm:$0x1]
    %v137 = vld [vmem:[#allocation7 + $0xb] sm:$0x1]
    %v138 = vld [vmem:[#allocation7 + $0xc] sm:$0x1]
    %v139 = vld [vmem:[#allocation7 + $0xd] sm:$0x1]
    %v140 = vld [vmem:[#allocation7 + $0xe] sm:$0x1]
    %v141 = vld [vmem:[#allocation7 + $0xf] sm:$0x1]
    %v144 = vpack.i.b16 %v127, %v126
    %v145 = vshrl.u32 %v126, 16
    %v146 = vshrl.u32 %v127, 16
    %v147 = vpack.i.b16 %v146, %v145
    %v150 = vpack.i.b16 %v129, %v128
    %v151 = vshrl.u32 %v128, 16
    %v152 = vshrl.u32 %v129, 16
    %v153 = vpack.i.b16 %v152, %v151
    %v156 = vpack.i.b16 %v131, %v130
    %v157 = vshrl.u32 %v130, 16
    %v158 = vshrl.u32 %v131, 16
    %v159 = vpack.i.b16 %v158, %v157
    %v162 = vpack.i.b16 %v133, %v132
    %v163 = vshrl.u32 %v132, 16
    %v164 = vshrl.u32 %v133, 16
    %v165 = vpack.i.b16 %v164, %v163
    %v168 = vpack.i.b16 %v135, %v134
    %v169 = vshrl.u32 %v134, 16
    %v170 = vshrl.u32 %v135, 16
    %v171 = vpack.i.b16 %v170, %v169
    %v174 = vpack.i.b16 %v137, %v136
    %v175 = vshrl.u32 %v136, 16
    %v176 = vshrl.u32 %v137, 16
    %v177 = vpack.i.b16 %v176, %v175
    %v180 = vpack.i.b16 %v139, %v138
    %v181 = vshrl.u32 %v138, 16
    %v182 = vshrl.u32 %v139, 16
    %v183 = vpack.i.b16 %v182, %v181
    %v186 = vpack.i.b16 %v141, %v140
    %v187 = vshrl.u32 %v140, 16
    %v188 = vshrl.u32 %v141, 16
    %v189 = vpack.i.b16 %v188, %v187
    %v190 = vld [vmem:[#allocation2] sm:$0x3]
    %v191 = vld [vmem:[#allocation8] sm:$0xf]
    %v192 = vld [vmem:[#allocation8 + $0x4] sm:$0xf]
    %v193 = vld [vmem:[#allocation8 + $0x8] sm:$0xf]
    %v194 = vld [vmem:[#allocation8 + $0xc] sm:$0xf]
    %v195 = vcombine.low %v104, %v110
    %v196 = vcombine.low %v116, %v122
    %v197 = vcombine.low %v107, %v113
    %v198 = vcombine.low %v119, %v125
    %v200 = vunpack.c.l.s4 1966171168
    %v201 = vunpack.c.0.s8 %v200
    %v202 = vlaneseq
    %v203 = vshrl.u32 %v202, 7
    %v204 = vsub.s32 %v201, %v203
    %v205 = vrot.slane %v195, %v204
    %v207 = vunpack.c.l.s4 1966171168
    %v208 = vunpack.c.0.s8 %v207
    %v209 = vlaneseq
    %v210 = vshrl.u32 %v209, 7
    %v211 = vsub.s32 %v208, %v210
    %v212 = vrot.slane %v196, %v211
    %v214 = vunpack.c.l.s4 1966171168
    %v215 = vunpack.c.0.s8 %v214
    %v216 = vlaneseq
    %v217 = vshrl.u32 %v216, 7
    %v218 = vsub.s32 %v215, %v217
    %v219 = vrot.slane %v197, %v218
    %v221 = vunpack.c.l.s4 1966171168
    %v222 = vunpack.c.0.s8 %v221
    %v223 = vlaneseq
    %v224 = vshrl.u32 %v223, 7
    %v225 = vsub.s32 %v222, %v224
    %v226 = vrot.slane %v198, %v225
    %v227 = vcombine.low %v205, %v212
    %v228 = vcombine.low %v219, %v226
    %v230 = vunpack.c.l.s4 1966171168
    %v231 = vunpack.c.0.s8 %v230
    %v232 = vlaneseq
    %v233 = vshrl.u32 %v232, 7
    %v234 = vsub.s32 %v231, %v233
    %v235 = vrot.slane %v227, %v234
    %v237 = vunpack.c.l.s4 1966171168
    %v238 = vunpack.c.0.s8 %v237
    %v239 = vlaneseq
    %v240 = vshrl.u32 %v239, 7
    %v241 = vsub.s32 %v238, %v240
    %v242 = vrot.slane %v228, %v241
    %v243 = vcombine.low %v235, %v242
    %v248 = vunpack.c.l.b16 %v191
    %v249 = vunpack.c.l.b16 %v192
    %v250 = vunpack.c.l.b16 %v193
    %v251 = vunpack.c.l.b16 %v194
    %v252 = vpack.c.b16 %v249, %v248
    %v253 = vpack.c.b16 %v251, %v250
    %vm256 = vcmask 261120
    %v258 = vsel %vm256, %v243, 0
    %260 = vmatprep.subr.bf16.mxu0 0
    %261 = vmatpush1.bf16.msra.mxu0 %v252
    %262 = vmatprep.subr.bf16.mxu0 0
    %263 = vmatpush1.bf16.msra.mxu0 %v253
    %264 = vmatprep.subr.bf16.mxu0 0
    %265 = vmatpush1.bf16.msra.mxu0 0
    %266 = vmatprep.subr.bf16.mxu0 0
    %267 = vmatpush1.bf16.msra.mxu0 0
    %268 = vmatprep.subr.bf16.mxu0 0
    %269 = vmatpush1.bf16.msra.mxu0 0
    %270 = vmatprep.subr.bf16.mxu0 0
    %271 = vmatpush1.bf16.msra.mxu0 0
    %272 = vmatprep.subr.bf16.mxu0 0
    %273 = vmatpush1.bf16.msra.mxu0 0
    %274 = vmatprep.subr.bf16.mxu0 0
    %275 = vmatpush1.bf16.msra.mxu0 0
    %276 = vmatprep.subr.bf16.mxu0 0
    %277 = vmatpush1.bf16.msra.mxu0 0
    %278 = vmatprep.subr.bf16.mxu0 0
    %279 = vmatpush1.bf16.msra.mxu0 0
    %280 = vmatprep.subr.bf16.mxu0 0
    %281 = vmatpush1.bf16.msra.mxu0 0
    %282 = vmatprep.subr.bf16.mxu0 0
    %283 = vmatpush1.bf16.msra.mxu0 0
    %284 = vmatprep.subr.bf16.mxu0 0
    %285 = vmatpush1.bf16.msra.mxu0 0
    %286 = vmatprep.subr.bf16.mxu0 0
    %287 = vmatpush1.bf16.msra.mxu0 0
    %288 = vmatprep.subr.bf16.mxu0 0
    %289 = vmatpush1.bf16.msra.mxu0 0
    %290 = vmatprep.subr.bf16.mxu0 0
    %291 = vmatpush1.bf16.msra.mxu0 0
    %292 = vmatprep.mubr.bf16.mxu0 0
    %293 = vmatmul.mubr.bf16.gmra.mrb[0].mxu0 %v258
    %v294 = vpop.f32.mrb[0].mxu0
    %v295 = vadd.f32 0.0, %v294
    %v296 = vpop.f32.mrb[0].mxu0
    %v297 = vpop.f32.mrb[0].mxu0
    %v298 = vadd.f32 0.0, %v297
    %v299 = vpop.f32.mrb[0].mxu0
    %300 = vdwg.mxu0
    %v301 = vpack.c.bf16 %v295, %v295
    %v302 = vpack.c.bf16 %v298, %v298
    %v305 = vunpack.c.l.s4 1966171168
    %v306 = vunpack.c.0.s8 %v305
    %v307 = vlaneseq
    %v308 = vshrl.u32 %v307, 7
    %v309 = vsub.s32 %v306, %v308
    %v310 = vrot.slane %v190, %v309
    %v311 = vcombine.high %v310, %v310
    %v313 = vunpack.c.l.s4 1966171168
    %v314 = vunpack.c.0.s8 %v313
    %v315 = vlaneseq
    %v316 = vshrl.u32 %v315, 7
    %v317 = vsub.s32 %v314, %v316
    %v318 = vrot.slane %v310, %v317
    %v320 = vunpack.c.l.s4 1966171168
    %v321 = vunpack.c.0.s8 %v320
    %v322 = vlaneseq
    %v323 = vshrl.u32 %v322, 7
    %v324 = vsub.s32 %v321, %v323
    %v325 = vrot.slane %v311, %v324
    %v326 = vlaneseq
    %v327 = vshrl.u32 %v326, 7
    %v328 = vsub.s32 0, %v327
    %v329 = vrot.slane %v318, %v328
    %v330 = vlaneseq
    %v331 = vshrl.u32 %v330, 7
    %v332 = vsub.s32 0, %v331
    %v333 = vrot.slane %v325, %v332
    %v336 = vcombine.low %v144, %v150
    %v337 = vcombine.low %v156, %v162
    %v338 = vcombine.low %v168, %v174
    %v339 = vcombine.low %v180, %v186
    %v341 = vunpack.c.l.s4 1966171168
    %v342 = vunpack.c.0.s8 %v341
    %v343 = vlaneseq
    %v344 = vshrl.u32 %v343, 7
    %v345 = vsub.s32 %v342, %v344
    %v346 = vrot.slane %v336, %v345
    %v348 = vunpack.c.l.s4 1966171168
    %v349 = vunpack.c.0.s8 %v348
    %v350 = vlaneseq
    %v351 = vshrl.u32 %v350, 7
    %v352 = vsub.s32 %v349, %v351
    %v353 = vrot.slane %v337, %v352
    %v355 = vunpack.c.l.s4 1966171168
    %v356 = vunpack.c.0.s8 %v355
    %v357 = vlaneseq
    %v358 = vshrl.u32 %v357, 7
    %v359 = vsub.s32 %v356, %v358
    %v360 = vrot.slane %v338, %v359
    %v362 = vunpack.c.l.s4 1966171168
    %v363 = vunpack.c.0.s8 %v362
    %v364 = vlaneseq
    %v365 = vshrl.u32 %v364, 7
    %v366 = vsub.s32 %v363, %v365
    %v367 = vrot.slane %v339, %v366
    %v368 = vcombine.low %v346, %v353
    %v369 = vcombine.low %v360, %v367
    %v371 = vunpack.c.l.s4 1966171168
    %v372 = vunpack.c.0.s8 %v371
    %v373 = vlaneseq
    %v374 = vshrl.u32 %v373, 7
    %v375 = vsub.s32 %v372, %v374
    %v376 = vrot.slane %v368, %v375
    %v378 = vunpack.c.l.s4 1966171168
    %v379 = vunpack.c.0.s8 %v378
    %v380 = vlaneseq
    %v381 = vshrl.u32 %v380, 7
    %v382 = vsub.s32 %v379, %v381
    %v383 = vrot.slane %v369, %v382
    %v384 = vcombine.low %v376, %v383
    %v386 = vsel %vm256, %v301, 0
    %v389 = vsel %vm256, %v384, 0
    %391 = vmatprep.subr.bf16.mxu0 0
    %392 = vmatpush1.bf16.xpose.msra.mxu0 %v389
    %393 = vmatprep.subr.bf16.mxu0 0
    %394 = vmatpush1.bf16.xpose.msra.mxu0 0
    %395 = vmatprep.subr.bf16.mxu0 0
    %396 = vmatpush1.bf16.xpose.msra.mxu0 0
    %397 = vmatprep.subr.bf16.mxu0 0
    %398 = vmatpush1.bf16.xpose.msra.mxu0 0
    %399 = vmatprep.subr.bf16.mxu0 0
    %400 = vmatpush1.bf16.xpose.msra.mxu0 0
    %401 = vmatprep.subr.bf16.mxu0 0
    %402 = vmatpush1.bf16.xpose.msra.mxu0 0
    %403 = vmatprep.subr.bf16.mxu0 0
    %404 = vmatpush1.bf16.xpose.msra.mxu0 0
    %405 = vmatprep.subr.bf16.mxu0 0
    %406 = vmatpush1.bf16.xpose.msra.mxu0 0
    %407 = vmatprep.subr.bf16.mxu0 0
    %408 = vmatpush1.bf16.xpose.msra.mxu0 0
    %409 = vmatprep.subr.bf16.mxu0 0
    %410 = vmatpush1.bf16.xpose.msra.mxu0 0
    %411 = vmatprep.subr.bf16.mxu0 0
    %412 = vmatpush1.bf16.xpose.msra.mxu0 0
    %413 = vmatprep.subr.bf16.mxu0 0
    %414 = vmatpush1.bf16.xpose.msra.mxu0 0
    %415 = vmatprep.subr.bf16.mxu0 0
    %416 = vmatpush1.bf16.xpose.msra.mxu0 0
    %417 = vmatprep.subr.bf16.mxu0 0
    %418 = vmatpush1.bf16.xpose.msra.mxu0 0
    %419 = vmatprep.subr.bf16.mxu0 0
    %420 = vmatpush1.bf16.xpose.msra.mxu0 0
    %421 = vmatprep.subr.bf16.mxu0 0
    %422 = vmatpush1.bf16.xpose.msra.mxu0 0
    %423 = vmatprep.mubr.bf16.mxu0 0
    %424 = vmatmul.mubr.bf16.gmra.mrb[0].mxu0 %v386
    %v425 = vpop.f32.mrb[0].mxu0
    %v426 = vadd.f32 %v329, %v425
    %v427 = vpop.f32.mrb[0].mxu0
    %v428 = vpop.f32.mrb[0].mxu0
    %v429 = vpop.f32.mrb[0].mxu0
    %430 = vdwg.mxu0
    %v431 = vcombine.low %v147, %v153
    %v432 = vcombine.low %v159, %v165
    %v433 = vcombine.low %v171, %v177
    %v434 = vcombine.low %v183, %v189
    %v436 = vunpack.c.l.s4 1966171168
    %v437 = vunpack.c.0.s8 %v436
    %v438 = vlaneseq
    %v439 = vshrl.u32 %v438, 7
    %v440 = vsub.s32 %v437, %v439
    %v441 = vrot.slane %v431, %v440
    %v443 = vunpack.c.l.s4 1966171168
    %v444 = vunpack.c.0.s8 %v443
    %v445 = vlaneseq
    %v446 = vshrl.u32 %v445, 7
    %v447 = vsub.s32 %v444, %v446
    %v448 = vrot.slane %v432, %v447
    %v450 = vunpack.c.l.s4 1966171168
    %v451 = vunpack.c.0.s8 %v450
    %v452 = vlaneseq
    %v453 = vshrl.u32 %v452, 7
    %v454 = vsub.s32 %v451, %v453
    %v455 = vrot.slane %v433, %v454
    %v457 = vunpack.c.l.s4 1966171168
    %v458 = vunpack.c.0.s8 %v457
    %v459 = vlaneseq
    %v460 = vshrl.u32 %v459, 7
    %v461 = vsub.s32 %v458, %v460
    %v462 = vrot.slane %v434, %v461
    %v463 = vcombine.low %v441, %v448
    %v464 = vcombine.low %v455, %v462
    %v466 = vunpack.c.l.s4 1966171168
    %v467 = vunpack.c.0.s8 %v466
    %v468 = vlaneseq
    %v469 = vshrl.u32 %v468, 7
    %v470 = vsub.s32 %v467, %v469
    %v471 = vrot.slane %v463, %v470
    %v473 = vunpack.c.l.s4 1966171168
    %v474 = vunpack.c.0.s8 %v473
    %v475 = vlaneseq
    %v476 = vshrl.u32 %v475, 7
    %v477 = vsub.s32 %v474, %v476
    %v478 = vrot.slane %v464, %v477
    %v479 = vcombine.low %v471, %v478
    %v481 = vsel %vm256, %v302, 0
    %v484 = vsel %vm256, %v479, 0
    %486 = vmatprep.subr.bf16.mxu0 0
    %487 = vmatpush1.bf16.xpose.msra.mxu0 %v484
    %488 = vmatprep.subr.bf16.mxu0 0
    %489 = vmatpush1.bf16.xpose.msra.mxu0 0
    %490 = vmatprep.subr.bf16.mxu0 0
    %491 = vmatpush1.bf16.xpose.msra.mxu0 0
    %492 = vmatprep.subr.bf16.mxu0 0
    %493 = vmatpush1.bf16.xpose.msra.mxu0 0
    %494 = vmatprep.subr.bf16.mxu0 0
    %495 = vmatpush1.bf16.xpose.msra.mxu0 0
    %496 = vmatprep.subr.bf16.mxu0 0
    %497 = vmatpush1.bf16.xpose.msra.mxu0 0
    %498 = vmatprep.subr.bf16.mxu0 0
    %499 = vmatpush1.bf16.xpose.msra.mxu0 0
    %500 = vmatprep.subr.bf16.mxu0 0
    %501 = vmatpush1.bf16.xpose.msra.mxu0 0
    %502 = vmatprep.subr.bf16.mxu0 0
    %503 = vmatpush1.bf16.xpose.msra.mxu0 0
    %504 = vmatprep.subr.bf16.mxu0 0
    %505 = vmatpush1.bf16.xpose.msra.mxu0 0
    %506 = vmatprep.subr.bf16.mxu0 0
    %507 = vmatpush1.bf16.xpose.msra.mxu0 0
    %508 = vmatprep.subr.bf16.mxu0 0
    %509 = vmatpush1.bf16.xpose.msra.mxu0 0
    %510 = vmatprep.subr.bf16.mxu0 0
    %511 = vmatpush1.bf16.xpose.msra.mxu0 0
    %512 = vmatprep.subr.bf16.mxu0 0
    %513 = vmatpush1.bf16.xpose.msra.mxu0 0
    %514 = vmatprep.subr.bf16.mxu0 0
    %515 = vmatpush1.bf16.xpose.msra.mxu0 0
    %516 = vmatprep.subr.bf16.mxu0 0
    %517 = vmatpush1.bf16.xpose.msra.mxu0 0
    %518 = vmatprep.mubr.bf16.mxu0 0
    %519 = vmatmul.mubr.bf16.gmra.mrb[0].mxu0 %v481
    %v520 = vpop.f32.mrb[0].mxu0
    %v521 = vadd.f32 %v333, %v520
    %v522 = vpop.f32.mrb[0].mxu0
    %v523 = vpop.f32.mrb[0].mxu0
    %v524 = vpop.f32.mrb[0].mxu0
    %525 = vdwg.mxu0
    %vm526 = vcmask 130048
    %v527 = vsel %vm526, %v426, -inf
    %528 = vmax.xlane.f32.xlu0 %v527
    %v529 = vpop.xlane.xlu0 %528
    %v530 = vsel %vm526, %v521, -inf
    %531 = vmax.xlane.f32.xlu0 %v530
    %v532 = vpop.xlane.xlu0 %531
    %v533 = vsub.f32 %v426, %v529
    %v534 = vsub.f32 %v521, %v532
    %v535 = vmul.f32 %v533, 1.442695
    %v536 = vpow.pop %v535
    %v537 = vmul.f32 %v534, 1.442695
    %v538 = vpow.pop %v537
    %v539 = vsel %vm526, %v536, 0.0
    %540 = vadd.xlane.f32.xlu0 %v539
    %v541 = vpop.xlane.xlu0 %540
    %v542 = vsel %vm526, %v538, 0.0
    %543 = vadd.xlane.f32.xlu0 %v542
    %v544 = vpop.xlane.xlu0 %543
    %v545 = vrcp.pop %v541
    %v546 = vmul.f32 %v536, %v545
    %v547 = vrcp.pop %v544
    %v548 = vmul.f32 %v538, %v547
    %549 = vst.msk [vmem:[#allocation12] sm:$0xff] %vm526, %v546
    %550 = vst.msk [vmem:[#allocation12 + $0x8] sm:$0xff] %vm526, %v548
    %v551 = vpack.c.bf16 %v546, %v546
    %v552 = vpack.c.bf16 %v548, %v548
    %v555 = vsel %vm526, %v551, 0
    %557 = vmatprep.subr.bf16.mxu0 0
    %558 = vmatpush1.bf16.msra.mxu0 %v384
    %559 = vmatprep.subr.bf16.mxu0 0
    %560 = vmatpush1.bf16.msra.mxu0 0
    %561 = vmatprep.subr.bf16.mxu0 0
    %562 = vmatpush1.bf16.msra.mxu0 0
    %563 = vmatprep.subr.bf16.mxu0 0
    %564 = vmatpush1.bf16.msra.mxu0 0
    %565 = vmatprep.subr.bf16.mxu0 0
    %566 = vmatpush1.bf16.msra.mxu0 0
    %567 = vmatprep.subr.bf16.mxu0 0
    %568 = vmatpush1.bf16.msra.mxu0 0
    %569 = vmatprep.subr.bf16.mxu0 0
    %570 = vmatpush1.bf16.msra.mxu0 0
    %571 = vmatprep.subr.bf16.mxu0 0
    %572 = vmatpush1.bf16.msra.mxu0 0
    %573 = vmatprep.subr.bf16.mxu0 0
    %574 = vmatpush1.bf16.msra.mxu0 0
    %575 = vmatprep.subr.bf16.mxu0 0
    %576 = vmatpush1.bf16.msra.mxu0 0
    %577 = vmatprep.subr.bf16.mxu0 0
    %578 = vmatpush1.bf16.msra.mxu0 0
    %579 = vmatprep.subr.bf16.mxu0 0
    %580 = vmatpush1.bf16.msra.mxu0 0
    %581 = vmatprep.subr.bf16.mxu0 0
    %582 = vmatpush1.bf16.msra.mxu0 0
    %583 = vmatprep.subr.bf16.mxu0 0
    %584 = vmatpush1.bf16.msra.mxu0 0
    %585 = vmatprep.subr.bf16.mxu0 0
    %586 = vmatpush1.bf16.msra.mxu0 0
    %587 = vmatprep.subr.bf16.mxu0 0
    %588 = vmatpush1.bf16.msra.mxu0 0
    %589 = vmatprep.mubr.bf16.mxu0 0
    %590 = vmatmul.mubr.bf16.gmra.mrb[0].mxu0 %v555
    %v591 = vpop.f32.mrb[0].mxu0
    %v592 = vadd.f32 0.0, %v591
    %v593 = vpop.f32.mrb[0].mxu0
    %v594 = vpop.f32.mrb[0].mxu0
    %v595 = vpop.f32.mrb[0].mxu0
    %596 = vdwg.mxu0
    %v599 = vsel %vm526, %v552, 0
    %601 = vmatprep.subr.bf16.mxu0 0
    %602 = vmatpush1.bf16.msra.mxu0 %v479
    %603 = vmatprep.subr.bf16.mxu0 0
    %604 = vmatpush1.bf16.msra.mxu0 0
    %605 = vmatprep.subr.bf16.mxu0 0
    %606 = vmatpush1.bf16.msra.mxu0 0
    %607 = vmatprep.subr.bf16.mxu0 0
    %608 = vmatpush1.bf16.msra.mxu0 0
    %609 = vmatprep.subr.bf16.mxu0 0
    %610 = vmatpush1.bf16.msra.mxu0 0
    %611 = vmatprep.subr.bf16.mxu0 0
    %612 = vmatpush1.bf16.msra.mxu0 0
    %613 = vmatprep.subr.bf16.mxu0 0
    %614 = vmatpush1.bf16.msra.mxu0 0
    %615 = vmatprep.subr.bf16.mxu0 0
    %616 = vmatpush1.bf16.msra.mxu0 0
    %617 = vmatprep.subr.bf16.mxu0 0
    %618 = vmatpush1.bf16.msra.mxu0 0
    %619 = vmatprep.subr.bf16.mxu0 0
    %620 = vmatpush1.bf16.msra.mxu0 0
    %621 = vmatprep.subr.bf16.mxu0 0
    %622 = vmatpush1.bf16.msra.mxu0 0
    %623 = vmatprep.subr.bf16.mxu0 0
    %624 = vmatpush1.bf16.msra.mxu0 0
    %625 = vmatprep.subr.bf16.mxu0 0
    %626 = vmatpush1.bf16.msra.mxu0 0
    %627 = vmatprep.subr.bf16.mxu0 0
    %628 = vmatpush1.bf16.msra.mxu0 0
    %629 = vmatprep.subr.bf16.mxu0 0
    %630 = vmatpush1.bf16.msra.mxu0 0
    %631 = vmatprep.subr.bf16.mxu0 0
    %632 = vmatpush1.bf16.msra.mxu0 0
    %633 = vmatprep.mubr.bf16.mxu0 0
    %634 = vmatmul.mubr.bf16.gmra.mrb[0].mxu0 %v599
    %v635 = vpop.f32.mrb[0].mxu0
    %v636 = vadd.f32 0.0, %v635
    %v637 = vpop.f32.mrb[0].mxu0
    %v638 = vpop.f32.mrb[0].mxu0
    %v639 = vpop.f32.mrb[0].mxu0
    %640 = vdwg.mxu0
    %v641 = vpack.c.bf16 %v636, %v592
    %v642 = vld [vmem:[#allocation10] sm:$0xf]
    %v643 = vld [vmem:[#allocation10 + $0x4] sm:$0xf]
    %v644 = vld [vmem:[#allocation10 + $0x8] sm:$0xf]
    %v645 = vld [vmem:[#allocation10 + $0xc] sm:$0xf]
    %v646 = vld [vmem:[%s5] sm:$0xf]
    %v647 = vld [vmem:[%s5 + $0x4] sm:$0xf]
    %v648 = vld [vmem:[%s5 + $0x8] sm:$0xf]
    %v649 = vld [vmem:[%s5 + $0xc] sm:$0xf]
    %v654 = vunpack.c.l.b16 %v646
    %v655 = vunpack.c.l.b16 %v647
    %v656 = vunpack.c.l.b16 %v648
    %v657 = vunpack.c.l.b16 %v649
    %v658 = vpack.c.b16 %v655, %v654
    %v659 = vpack.c.b16 %v657, %v656
    %662 = vmatprep.subr.bf16.mxu0 0
    %663 = vmatpush1.bf16.msra.mxu0 %v658
    %664 = vmatprep.subr.bf16.mxu0 0
    %665 = vmatpush1.bf16.msra.mxu0 %v659
    %666 = vmatprep.subr.bf16.mxu0 0
    %667 = vmatpush1.bf16.msra.mxu0 0
    %668 = vmatprep.subr.bf16.mxu0 0
    %669 = vmatpush1.bf16.msra.mxu0 0
    %670 = vmatprep.subr.bf16.mxu0 0
    %671 = vmatpush1.bf16.msra.mxu0 0
    %672 = vmatprep.subr.bf16.mxu0 0
    %673 = vmatpush1.bf16.msra.mxu0 0
    %674 = vmatprep.subr.bf16.mxu0 0
    %675 = vmatpush1.bf16.msra.mxu0 0
    %676 = vmatprep.subr.bf16.mxu0 0
    %677 = vmatpush1.bf16.msra.mxu0 0
    %678 = vmatprep.subr.bf16.mxu0 0
    %679 = vmatpush1.bf16.msra.mxu0 0
    %680 = vmatprep.subr.bf16.mxu0 0
    %681 = vmatpush1.bf16.msra.mxu0 0
    %682 = vmatprep.subr.bf16.mxu0 0
    %683 = vmatpush1.bf16.msra.mxu0 0
    %684 = vmatprep.subr.bf16.mxu0 0
    %685 = vmatpush1.bf16.msra.mxu0 0
    %686 = vmatprep.subr.bf16.mxu0 0
    %687 = vmatpush1.bf16.msra.mxu0 0
    %688 = vmatprep.subr.bf16.mxu0 0
    %689 = vmatpush1.bf16.msra.mxu0 0
    %690 = vmatprep.subr.bf16.mxu0 0
    %691 = vmatpush1.bf16.msra.mxu0 0
    %692 = vmatprep.subr.bf16.mxu0 0
    %693 = vmatpush1.bf16.msra.mxu0 0
    %694 = vmatprep.mubr.bf16.mxu0 0
    %695 = vmatmul.mubr.bf16.gmra.mrb[0].mxu0 %v258
    %v696 = vpop.f32.mrb[0].mxu0
    %v697 = vadd.f32 0.0, %v696
    %v698 = vpop.f32.mrb[0].mxu0
    %v699 = vpop.f32.mrb[0].mxu0
    %v700 = vadd.f32 0.0, %v699
    %v701 = vpop.f32.mrb[0].mxu0
    %702 = vdwg.mxu0
    %v707 = vunpack.c.l.b16 %v642
    %v708 = vunpack.c.l.b16 %v643
    %v709 = vunpack.c.l.b16 %v644
    %v710 = vunpack.c.l.b16 %v645
    %v711 = vpack.c.b16 %v708, %v707
    %v712 = vpack.c.b16 %v710, %v709
    %v716 = vsel %vm256, %v641, 0
    %718 = vmatprep.subr.bf16.mxu0 0
    %719 = vmatpush1.bf16.msra.mxu0 %v711
    %720 = vmatprep.subr.bf16.mxu0 0
    %721 = vmatpush1.bf16.msra.mxu0 %v712
    %722 = vmatprep.subr.bf16.mxu0 0
    %723 = vmatpush1.bf16.msra.mxu0 0
    %724 = vmatprep.subr.bf16.mxu0 0
    %725 = vmatpush1.bf16.msra.mxu0 0
    %726 = vmatprep.subr.bf16.mxu0 0
    %727 = vmatpush1.bf16.msra.mxu0 0
    %728 = vmatprep.subr.bf16.mxu0 0
    %729 = vmatpush1.bf16.msra.mxu0 0
    %730 = vmatprep.subr.bf16.mxu0 0
    %731 = vmatpush1.bf16.msra.mxu0 0
    %732 = vmatprep.subr.bf16.mxu0 0
    %733 = vmatpush1.bf16.msra.mxu0 0
    %734 = vmatprep.subr.bf16.mxu0 0
    %735 = vmatpush1.bf16.msra.mxu0 0
    %736 = vmatprep.subr.bf16.mxu0 0
    %737 = vmatpush1.bf16.msra.mxu0 0
    %738 = vmatprep.subr.bf16.mxu0 0
    %739 = vmatpush1.bf16.msra.mxu0 0
    %740 = vmatprep.subr.bf16.mxu0 0
    %741 = vmatpush1.bf16.msra.mxu0 0
    %742 = vmatprep.subr.bf16.mxu0 0
    %743 = vmatpush1.bf16.msra.mxu0 0
    %744 = vmatprep.subr.bf16.mxu0 0
    %745 = vmatpush1.bf16.msra.mxu0 0
    %746 = vmatprep.subr.bf16.mxu0 0
    %747 = vmatpush1.bf16.msra.mxu0 0
    %748 = vmatprep.subr.bf16.mxu0 0
    %749 = vmatpush1.bf16.msra.mxu0 0
    %750 = vmatprep.mubr.bf16.mxu0 0
    %751 = vmatmul.mubr.bf16.gmra.mrb[0].mxu0 %v716
    %v752 = vpop.f32.mrb[0].mxu0
    %v753 = vadd.f32 %v697, %v752
    %v754 = vpop.f32.mrb[0].mxu0
    %v755 = vpop.f32.mrb[0].mxu0
    %v756 = vadd.f32 %v700, %v755
    %v757 = vpop.f32.mrb[0].mxu0
    %758 = vdwg.mxu0
    %v759 = vtanh.pop %v753
    %v760 = vtanh.pop %v756
    %761 = vst.msk [vmem:[#allocation11] sm:$0xff] %vm256, %v759
    %762 = vst.msk [vmem:[#allocation11 + $0x8] sm:$0xff] %vm256, %v760
    // Predicated region
    $region46: #{tpu_custom_call.1} parent=1 // pred_check
      _
    $region47: #{tpu_custom_call.1} parent=1 // pred_check_branch
      %764 = sbr.rel (0) target = $region49
    $region48: #{tpu_custom_call.1} parent=1 // pred_region
      %s766 = ssub.s32 256, 256
      %767 = vsyncadd [#allocation4], %s766
      %s768 = sshll.u32 [#allocation11], 4
      %s769 = int_to_ptr.vmem [resolvable:$true] %s768
      %774 = dma.vmem_to_hbm [thread:$0]  %s769, 256, %s6, [#allocation4], 128, 128, 8
    $region49: #{tpu_custom_call.1} parent=1 // pred_fallthru
      _
    // Predicated region
    $region50: #{tpu_custom_call.1} parent=1 // pred_check
      _
    $region51: #{tpu_custom_call.1} parent=1 // pred_check_branch
      %776 = sbr.rel (0) target = $region53
    $region52: #{tpu_custom_call.1} parent=1 // pred_region
      %s778 = ssub.s32 256, 256
      %779 = vsyncadd [#allocation13], %s778
      %s780 = sshll.u32 [#allocation12], 4
      %s781 = int_to_ptr.vmem [resolvable:$true] %s780
      %786 = dma.vmem_to_hbm [thread:$0]  %s781, 256, %s7, [#allocation13], 128, 128, 8
    $region53: #{tpu_custom_call.1} parent=1 // pred_fallthru
      _
    // Predicated region
    $region54: #{tpu_custom_call.1} parent=1 // pred_check
      _
    $region55: #{tpu_custom_call.1} parent=1 // pred_check_branch
      %788 = sbr.rel (0) target = $region57
    $region56: #{tpu_custom_call.1} parent=1 // pred_region
      %789 = dma.done [#allocation4], 256
    $region57: #{tpu_custom_call.1} parent=1 // pred_fallthru
      _
    // Predicated region
    $region58: #{tpu_custom_call.1} parent=1 // pred_check
      _
    $region59: #{tpu_custom_call.1} parent=1 // pred_check_branch
      %791 = sbr.rel (0) target = $region61
    $region60: #{tpu_custom_call.1} parent=1 // pred_region
      %792 = dma.done [#allocation13], 256
    $region61: #{tpu_custom_call.1} parent=1 // pred_fallthru
      _
    %793 = vsyncpa [#allocation3], 1
    %794 = vsyncpa [#allocation6], 1
    %795 = vsyncpa [#allocation9], 1
    %796 = vsyncpa [#allocation4], 1
    %797 = vsyncpa [#allocation13], 1

</llo_original>
